<compile_context>
chip_gen: v7x
topology: tpu7x:2x2x1
jax: 0.10.0
libtpu: 0.0.40
codegen_flags: <defaults>
</compile_context>

<pallas_src>
import functools

import jax
import jax.numpy as jnp
from jax.experimental import pallas as pl
from jax.experimental.pallas import tpu as pltpu

IN_F = 2
HIDDEN = 64
OUT_F = 180


def netc_kernel(x_ref, w1_ref, b1_ref, w2_ref, b2_ref, w3_ref, b3_ref, o_ref):
    x = x_ref[...]                                         # [TB, 2]

    # linear1 + relu  -- K=2 contraction done on the VPU (2 broadcast FMAs),
    # skipping a mostly-empty MXU pass.
    h = (x[:, 0:1] * w1_ref[0:1, :]
         + x[:, 1:2] * w1_ref[1:2, :]
         + b1_ref[...])                                    # [TB, 64]
    h = jnp.maximum(h, 0.0)

    # linear2 applied twice (as in the PyTorch forward), ReLU after each.
    w2 = w2_ref[...]
    b2 = b2_ref[...]
    h = jnp.maximum(
        jnp.dot(h, w2, preferred_element_type=jnp.float32) + b2, 0.0)
    h = jnp.maximum(
        jnp.dot(h, w2, preferred_element_type=jnp.float32) + b2, 0.0)

    # linear3 (no activation)
    o_ref[...] = (jnp.dot(h, w3_ref[...], preferred_element_type=jnp.float32)
                  + b3_ref[...])


def _round_up(n, m):
    return ((n + m - 1) // m) * m


def prepare_params(params):
    """One-time layout prep: weights -> [in, out], biases -> [1, out]."""
    w1, b1, w2, b2, w3, b3 = params
    return (jnp.asarray(w1.T), jnp.asarray(b1).reshape(1, -1),
            jnp.asarray(w2.T), jnp.asarray(b2).reshape(1, -1),
            jnp.asarray(w3.T), jnp.asarray(b3).reshape(1, -1))


@functools.partial(jax.jit, static_argnames=("block_b",))
def netc_forward(x, prepared, block_b=512):
    """x: [B, 2] float32 -> [B, 180] float32."""
    w1t, b1, w2t, b2, w3t, b3 = prepared
    B = x.shape[0]

    # Batch tile: at most block_b rows, always a multiple of 8 (sublane rule).
    tb = min(block_b, _round_up(B, 8))
    bp = _round_up(B, tb)
    if bp != B:
        x = jnp.pad(x, ((0, bp - B), (0, 0)))

    const_map = lambda i: (0, 0)          # weights/biases stay VMEM-resident

    out = pl.pallas_call(
        netc_kernel,
        out_shape=jax.ShapeDtypeStruct((bp, OUT_F), jnp.float32),
        grid=(bp // tb,),
        in_specs=[
            pl.BlockSpec((tb, IN_F), lambda i: (i, 0)),        # x
            pl.BlockSpec((IN_F, HIDDEN), const_map),           # w1^T
            pl.BlockSpec((1, HIDDEN), const_map),              # b1
            pl.BlockSpec((HIDDEN, HIDDEN), const_map),         # w2^T
            pl.BlockSpec((1, HIDDEN), const_map),              # b2
            pl.BlockSpec((HIDDEN, OUT_F), const_map),          # w3^T
            pl.BlockSpec((1, OUT_F), const_map),               # b3
        ],
        out_specs=pl.BlockSpec((tb, OUT_F), lambda i: (i, 0)),
        compiler_params=pltpu.CompilerParams(
            dimension_semantics=("parallel",)),
    )(x, w1t, b1, w2t, b2, w3t, b3)

    if bp != B:
        out = out[:B]
    return out


def init_params(key):
    """Deterministic init mirroring nn.Linear shapes (weight: [out, in])."""
    ks = jax.random.split(key, 6)

    def linear(kw, kb, out_f, in_f):
        bound = 1.0 / jnp.sqrt(in_f)
        w = jax.random.uniform(kw, (out_f, in_f), jnp.float32, -bound, bound)
        b = jax.random.uniform(kb, (out_f,), jnp.float32, -bound, bound)
        return w, b

    w1, b1 = linear(ks[0], ks[1], HIDDEN, IN_F)
    w2, b2 = linear(ks[2], ks[3], HIDDEN, HIDDEN)
    w3, b3 = linear(ks[4], ks[5], OUT_F, HIDDEN)
    return (w1, b1, w2, b2, w3, b3)


def netc_reference(x, params):
    """Plain-JAX reference of the PyTorch forward (linear2 applied twice)."""
    w1, b1, w2, b2, w3, b3 = params
    h = jnp.maximum(x @ w1.T + b1, 0.0)
    h = jnp.maximum(h @ w2.T + b2, 0.0)
    h = jnp.maximum(h @ w2.T + b2, 0.0)
    return h @ w3.T + b3


if __name__ == "__main__":
    key = jax.random.PRNGKey(0)
    k_param, k_x1, k_x2 = jax.random.split(key, 3)

    params = init_params(k_param)
    prepared = prepare_params(params)   # one-time layout prep (hoisted)

    # Small, tile-aligned batch.
    x = jax.random.normal(k_x1, (8, IN_F), jnp.float32)
    out = jax.block_until_ready(netc_forward(x, prepared))
    ref = netc_reference(x, params)
    assert out.shape == (8, OUT_F), out.shape
    assert jnp.allclose(out, ref, atol=1e-4, rtol=1e-4), "mismatch vs reference"

    # Ragged batch (exercises the pad + slice path).
    x2 = jax.random.normal(k_x2, (13, IN_F), jnp.float32)
    out2 = jax.block_until_ready(netc_forward(x2, prepared))
    ref2 = netc_reference(x2, params)
    assert out2.shape == (13, OUT_F), out2.shape
    assert jnp.allclose(out2, ref2, atol=1e-4, rtol=1e-4), "mismatch (ragged)"

    print("KERNEL_OK")
</pallas_src>

<mosaic_0001>
module attributes {stable_mosaic.version = 11 : i64} {
  func.func @netc_kernel(%arg0: i32, %arg1: memref<8x2xf32, #tpu.memory_space<vmem>>, %arg2: memref<2x64xf32, #tpu.memory_space<vmem>>, %arg3: memref<1x64xf32, #tpu.memory_space<vmem>>, %arg4: memref<64x64xf32, #tpu.memory_space<vmem>>, %arg5: memref<1x64xf32, #tpu.memory_space<vmem>>, %arg6: memref<64x180xf32, #tpu.memory_space<vmem>>, %arg7: memref<1x180xf32, #tpu.memory_space<vmem>>, %arg8: memref<8x180xf32, #tpu.memory_space<vmem>>) attributes {dimension_semantics = [#tpu.dimension_semantics<parallel>], iteration_bounds = array<i64: 1>, scalar_prefetch = 0 : i64, scratch_operands = 0 : i64, tpu.core_type = #tpu.core_type<tc>, window_params = [{transform_indices = @transform_0, window_bounds = array<i64: 8, 2>}, {pipeline_mode = #tpu.pipeline_mode<synchronous>, transform_indices = @transform_1, window_bounds = array<i64: 2, 64>}, {pipeline_mode = #tpu.pipeline_mode<synchronous>, transform_indices = @transform_2, window_bounds = array<i64: 1, 64>}, {pipeline_mode = #tpu.pipeline_mode<synchronous>, transform_indices = @transform_3, window_bounds = array<i64: 64, 64>}, {pipeline_mode = #tpu.pipeline_mode<synchronous>, transform_indices = @transform_4, window_bounds = array<i64: 1, 64>}, {pipeline_mode = #tpu.pipeline_mode<synchronous>, transform_indices = @transform_5, window_bounds = array<i64: 64, 180>}, {pipeline_mode = #tpu.pipeline_mode<synchronous>, transform_indices = @transform_6, window_bounds = array<i64: 1, 180>}, {transform_indices = @transform_7, window_bounds = array<i64: 8, 180>}]} {
    %c0 = arith.constant 0 : index
    %c0_0 = arith.constant 0 : index
    %0 = vector.load %arg1[%c0, %c0_0] : memref<8x2xf32, #tpu.memory_space<vmem>>, vector<8x2xf32>
    %1 = vector.extract_strided_slice %0 {offsets = [0, 0], sizes = [8, 1], strides = [1, 1]} : vector<8x2xf32> to vector<8x1xf32>
    %c0_1 = arith.constant 0 : index
    %c0_2 = arith.constant 0 : index
    %2 = vector.load %arg2[%c0_1, %c0_2] : memref<2x64xf32, #tpu.memory_space<vmem>>, vector<1x64xf32>
    %3 = vector.broadcast %1 : vector<8x1xf32> to vector<8x64xf32>
    %4 = vector.broadcast %2 : vector<1x64xf32> to vector<8x64xf32>
    %5 = arith.mulf %3, %4 : vector<8x64xf32>
    %6 = vector.extract_strided_slice %0 {offsets = [0, 1], sizes = [8, 1], strides = [1, 1]} : vector<8x2xf32> to vector<8x1xf32>
    %c1 = arith.constant 1 : index
    %c0_3 = arith.constant 0 : index
    %7 = vector.load %arg2[%c1, %c0_3] : memref<2x64xf32, #tpu.memory_space<vmem>>, vector<1x64xf32>
    %8 = vector.broadcast %6 : vector<8x1xf32> to vector<8x64xf32>
    %9 = vector.broadcast %7 : vector<1x64xf32> to vector<8x64xf32>
    %10 = arith.mulf %8, %9 : vector<8x64xf32>
    %11 = arith.addf %5, %10 : vector<8x64xf32>
    %c0_4 = arith.constant 0 : index
    %c0_5 = arith.constant 0 : index
    %12 = vector.load %arg3[%c0_4, %c0_5] : memref<1x64xf32, #tpu.memory_space<vmem>>, vector<1x64xf32>
    %13 = vector.broadcast %12 : vector<1x64xf32> to vector<8x64xf32>
    %14 = arith.addf %11, %13 : vector<8x64xf32>
    %cst = arith.constant 0.000000e+00 : f32
    %15 = vector.broadcast %cst : f32 to vector<8x64xf32>
    %16 = arith.maximumf %14, %15 : vector<8x64xf32>
    %c0_6 = arith.constant 0 : index
    %c0_7 = arith.constant 0 : index
    %17 = vector.load %arg4[%c0_6, %c0_7] : memref<64x64xf32, #tpu.memory_space<vmem>>, vector<64x64xf32>
    %c0_8 = arith.constant 0 : index
    %c0_9 = arith.constant 0 : index
    %18 = vector.load %arg5[%c0_8, %c0_9] : memref<1x64xf32, #tpu.memory_space<vmem>>, vector<1x64xf32>
    %cst_10 = arith.constant dense<0.000000e+00> : vector<8x64xf32>
    %19 = tpu.matmul %16, %17, %cst_10 {dimension_numbers = #tpu.dot_dimension_numbers<[1], [0], [0], [1], [0, 0, 1, 1], [], []>} : vector<8x64xf32>, vector<64x64xf32>, vector<8x64xf32> -> vector<8x64xf32>
    %20 = vector.broadcast %18 : vector<1x64xf32> to vector<8x64xf32>
    %21 = arith.addf %19, %20 : vector<8x64xf32>
    %cst_11 = arith.constant 0.000000e+00 : f32
    %22 = vector.broadcast %cst_11 : f32 to vector<8x64xf32>
    %23 = arith.maximumf %21, %22 : vector<8x64xf32>
    %cst_12 = arith.constant dense<0.000000e+00> : vector<8x64xf32>
    %24 = tpu.matmul %23, %17, %cst_12 {dimension_numbers = #tpu.dot_dimension_numbers<[1], [0], [0], [1], [0, 0, 1, 1], [], []>} : vector<8x64xf32>, vector<64x64xf32>, vector<8x64xf32> -> vector<8x64xf32>
    %25 = vector.broadcast %18 : vector<1x64xf32> to vector<8x64xf32>
    %26 = arith.addf %24, %25 : vector<8x64xf32>
    %cst_13 = arith.constant 0.000000e+00 : f32
    %27 = vector.broadcast %cst_13 : f32 to vector<8x64xf32>
    %28 = arith.maximumf %26, %27 : vector<8x64xf32>
    %c0_14 = arith.constant 0 : index
    %c0_15 = arith.constant 0 : index
    %29 = vector.load %arg6[%c0_14, %c0_15] : memref<64x180xf32, #tpu.memory_space<vmem>>, vector<64x180xf32>
    %cst_16 = arith.constant dense<0.000000e+00> : vector<8x180xf32>
    %30 = tpu.matmul %28, %29, %cst_16 {dimension_numbers = #tpu.dot_dimension_numbers<[1], [0], [0], [1], [0, 0, 1, 1], [], []>} : vector<8x64xf32>, vector<64x180xf32>, vector<8x180xf32> -> vector<8x180xf32>
    %c0_17 = arith.constant 0 : index
    %c0_18 = arith.constant 0 : index
    %31 = vector.load %arg7[%c0_17, %c0_18] : memref<1x180xf32, #tpu.memory_space<vmem>>, vector<1x180xf32>
    %32 = vector.broadcast %31 : vector<1x180xf32> to vector<8x180xf32>
    %33 = arith.addf %30, %32 : vector<8x180xf32>
    %c0_19 = arith.constant 0 : index
    %c0_20 = arith.constant 0 : index
    %34 = vector.load %arg8[%c0_19, %c0_20] : memref<8x180xf32, #tpu.memory_space<vmem>>, vector<8x180xf32>
    tpu.vector_store %arg8[%c0_19, %c0_20], %33 {strides = array<i32>} : memref<8x180xf32, #tpu.memory_space<vmem>>, vector<8x180xf32>,
    return
  }
  func.func @transform_0(%arg0: i32) -> (i32, i32) {
    %c0_i32 = arith.constant 0 : i32
    %c0_i32_0 = arith.constant 0 : i32
    return %arg0, %c0_i32 : i32, i32
  }
  func.func @transform_1(%arg0: i32) -> (i32, i32) {
    %c0_i32 = arith.constant 0 : i32
    %c0_i32_0 = arith.constant 0 : i32
    %c0_i32_1 = arith.constant 0 : i32
    return %c0_i32, %c0_i32_0 : i32, i32
  }
  func.func @transform_2(%arg0: i32) -> (i32, i32) {
    %c0_i32 = arith.constant 0 : i32
    %c0_i32_0 = arith.constant 0 : i32
    %c0_i32_1 = arith.constant 0 : i32
    return %c0_i32, %c0_i32_0 : i32, i32
  }
  func.func @transform_3(%arg0: i32) -> (i32, i32) {
    %c0_i32 = arith.constant 0 : i32
    %c0_i32_0 = arith.constant 0 : i32
    %c0_i32_1 = arith.constant 0 : i32
    return %c0_i32, %c0_i32_0 : i32, i32
  }
  func.func @transform_4(%arg0: i32) -> (i32, i32) {
    %c0_i32 = arith.constant 0 : i32
    %c0_i32_0 = arith.constant 0 : i32
    %c0_i32_1 = arith.constant 0 : i32
    return %c0_i32, %c0_i32_0 : i32, i32
  }
  func.func @transform_5(%arg0: i32) -> (i32, i32) {
    %c0_i32 = arith.constant 0 : i32
    %c0_i32_0 = arith.constant 0 : i32
    %c0_i32_1 = arith.constant 0 : i32
    return %c0_i32, %c0_i32_0 : i32, i32
  }
  func.func @transform_6(%arg0: i32) -> (i32, i32) {
    %c0_i32 = arith.constant 0 : i32
    %c0_i32_0 = arith.constant 0 : i32
    %c0_i32_1 = arith.constant 0 : i32
    return %c0_i32, %c0_i32_0 : i32, i32
  }
  func.func @transform_7(%arg0: i32) -> (i32, i32) {
    %c0_i32 = arith.constant 0 : i32
    %c0_i32_0 = arith.constant 0 : i32
    return %arg0, %c0_i32 : i32, i32
  }
}

</mosaic_0001>

<llo_original>
// kernel: netc_forward.1
$region0: #{netc_forward.1}
  #allocation0 [shape = 'u32[]', space=smem, size = 0x4, offset = 0x4, fixed_abs, tag = 'smem constant byte address 0x4 - core index']
  #allocation1 [shape = 'u32[144,128]{1,0:T(1,128)}', space=vmem, size = 0x12000, scoped, tag = 'internal scratch']
  %s0 = inlined_call_operand.vmem [shape: f32[8,2], index: 0, kind: input, shape index: {}]
  %s1 = inlined_call_operand.vmem [shape: f32[2,64], index: 1, kind: input, shape index: {}]
  %s2 = inlined_call_operand.vmem [shape: f32[1,64], index: 2, kind: input, shape index: {}]
  %s3 = inlined_call_operand.hbm [shape: f32[64,64], index: 3, kind: input, shape index: {}]
  %s4 = inlined_call_operand.vmem [shape: f32[1,64], index: 4, kind: input, shape index: {}]
  %s5 = inlined_call_operand.hbm [shape: f32[64,180], index: 5, kind: input, shape index: {}]
  %s6 = inlined_call_operand.vmem [shape: f32[1,180], index: 6, kind: input, shape index: {}]
  %s7 = inlined_call_operand.hbm [shape: f32[8,180], index: 7, kind: output, shape index: {}]
  %s8 = sld [smem:[#allocation0]]
  $region46: #{netc_forward.1} parent=0
    _
  %s10 = ssub.s32 1, %s8
  %s11 = scalar_select 0, %s10, %s8
  $region1: #{netc_forward.1} parent=0
    #allocation2 [shape = 'u8[32768]{0}', space=vmem, size = 0x8000, scoped, tag = 'input window, operand 3, single buffered']
    #allocation3 [shape = 's32[1]{0}', space=sflag, size = 0x4, scoped, tag = 'scoped memory for netc_forward.1']
    #allocation4 [shape = 's32[1]{0}', space=sflag, size = 0x4, scoped, tag = 'scoped memory for netc_forward.1']
    #allocation5 [shape = 'u8[65536]{0}', space=vmem, size = 0x10000, scoped, tag = 'input window, operand 5, single buffered']
    #allocation6 [shape = 's32[1]{0}', space=sflag, size = 0x4, scoped, tag = 'scoped memory for netc_forward.1']
    #allocation7 [shape = 'u8[8192]{0}', space=vmem, size = 0x2000, scoped, tag = 'output window, operand 0, single buffered']
    %12 = vsyncpa [#allocation3], 0
    %13 = vsyncpa [#allocation6], 0
    %14 = vsyncpa [#allocation4], 0
    // Predicated region
    $region2: #{netc_forward.1} parent=1 // pred_check
      _
    $region3: #{netc_forward.1} parent=1 // pred_check_branch
      %16 = sbr.rel (0) target = $region5
    $region4: #{netc_forward.1} parent=1 // pred_region
      _
    $region5: #{netc_forward.1} parent=1 // pred_fallthru
      _
    // Predicated region
    $region6: #{netc_forward.1} parent=1 // pred_check
      _
    $region7: #{netc_forward.1} parent=1 // pred_check_branch
      %18 = sbr.rel (0) target = $region9
    $region8: #{netc_forward.1} parent=1 // pred_region
      _
    $region9: #{netc_forward.1} parent=1 // pred_fallthru
      _
    // Predicated region
    $region10: #{netc_forward.1} parent=1 // pred_check
      _
    $region11: #{netc_forward.1} parent=1 // pred_check_branch
      %20 = sbr.rel (0) target = $region13
    $region12: #{netc_forward.1} parent=1 // pred_region
      _
    $region13: #{netc_forward.1} parent=1 // pred_fallthru
      _
    // Predicated region
    $region14: #{netc_forward.1} parent=1 // pred_check
      _
    $region15: #{netc_forward.1} parent=1 // pred_check_branch
      %22 = sbr.rel (0) target = $region17
    $region16: #{netc_forward.1} parent=1 // pred_region
      %s24 = ssub.s32 1024, 1024
      %25 = vsyncadd [#allocation3], %s24
      %s26 = sshll.u32 [#allocation2], 4
      %s27 = int_to_ptr.vmem [resolvable:$true] %s26
      %32 = dma.hbm_to_vmem [thread:$0]  %s3, 1024, %s27, [#allocation3], 128, 128, 8
    $region17: #{netc_forward.1} parent=1 // pred_fallthru
      _
    // Predicated region
    $region18: #{netc_forward.1} parent=1 // pred_check
      _
    $region19: #{netc_forward.1} parent=1 // pred_check_branch
      %34 = sbr.rel (0) target = $region21
    $region20: #{netc_forward.1} parent=1 // pred_region
      _
    $region21: #{netc_forward.1} parent=1 // pred_fallthru
      _
    // Predicated region
    $region22: #{netc_forward.1} parent=1 // pred_check
      _
    $region23: #{netc_forward.1} parent=1 // pred_check_branch
      %36 = sbr.rel (0) target = $region25
    $region24: #{netc_forward.1} parent=1 // pred_region
      %s38 = ssub.s32 2048, 2048
      %39 = vsyncadd [#allocation6], %s38
      %s40 = sshll.u32 [#allocation5], 4
      %s41 = int_to_ptr.vmem [resolvable:$true] %s40
      %46 = dma.hbm_to_vmem [thread:$0]  %s5, 2048, %s41, [#allocation6], 256, 256, 16
    $region25: #{netc_forward.1} parent=1 // pred_fallthru
      _
    // Predicated region
    $region26: #{netc_forward.1} parent=1 // pred_check
      _
    $region27: #{netc_forward.1} parent=1 // pred_check_branch
      %48 = sbr.rel (0) target = $region29
    $region28: #{netc_forward.1} parent=1 // pred_region
      _
    $region29: #{netc_forward.1} parent=1 // pred_fallthru
      _
    // Predicated region
    $region30: #{netc_forward.1} parent=1 // pred_check
      _
    $region31: #{netc_forward.1} parent=1 // pred_check_branch
      %50 = sbr.rel (0) target = $region33
    $region32: #{netc_forward.1} parent=1 // pred_region
      %51 = dma.done [#allocation3], 1024
    $region33: #{netc_forward.1} parent=1 // pred_fallthru
      _
    // Predicated region
    $region34: #{netc_forward.1} parent=1 // pred_check
      _
    $region35: #{netc_forward.1} parent=1 // pred_check_branch
      %53 = sbr.rel (0) target = $region37
    $region36: #{netc_forward.1} parent=1 // pred_region
      %54 = dma.done [#allocation6], 2048
    $region37: #{netc_forward.1} parent=1 // pred_fallthru
      _
    %v55 = vld [vmem:[%s0] sm:$0xff]
    %v56 = vld [vmem:[%s1] sm:$0x1]
    %58 = vset.pattern.permute.xlu0 0
    %59 = vperm.xlu0 %58, %v55
    %v60 = vpop.permute.xlu0 %59
    %v62 = vlaneseq
    %v63 = vshrl.u32 %v62, 7
    %v64 = vsub.s32 0, %v63
    %v65 = vrot.slane %v56, %v64
    %v66 = vmul.f32 %v60, %v65
    %v67 = vld [vmem:[%s1 + $0x1] sm:$0x1]
    %68 = vset.pattern.permute.xlu0 1
    %69 = vperm.xlu0 %68, %v55
    %v70 = vpop.permute.xlu0 %69
    %v72 = vlaneseq
    %v73 = vshrl.u32 %v72, 7
    %v74 = vsub.s32 0, %v73
    %v75 = vrot.slane %v67, %v74
    %v76 = vmul.f32 %v70, %v75
    %v77 = vadd.f32 %v66, %v76
    %v78 = vld [vmem:[%s2] sm:$0x1]
    %v80 = vlaneseq
    %v81 = vshrl.u32 %v80, 7
    %v82 = vsub.s32 0, %v81
    %v83 = vrot.slane %v78, %v82
    %v85 = vadd.f32 %v77, %v83
    %v86 = vmax.f32 %v85, 0.0
    %v87 = vld [vmem:[#allocation2] sm:$0xff]
    %v88 = vld [vmem:[#allocation2 + $0x8] sm:$0xff]
    %v89 = vld [vmem:[#allocation2 + $0x10] sm:$0xff]
    %v90 = vld [vmem:[#allocation2 + $0x18] sm:$0xff]
    %v91 = vld [vmem:[#allocation2 + $0x20] sm:$0xff]
    %v92 = vld [vmem:[#allocation2 + $0x28] sm:$0xff]
    %v93 = vld [vmem:[#allocation2 + $0x30] sm:$0xff]
    %v94 = vld [vmem:[#allocation2 + $0x38] sm:$0xff]
    %v95 = vld [vmem:[%s4] sm:$0x1]
    %v97 = vlaneseq
    %v98 = vshrl.u32 %v97, 7
    %v99 = vsub.s32 0, %v98
    %v100 = vrot.slane %v95, %v99
    %vm102 = vcmask 523264
    %v104 = vsel %vm102, %v86, 0
    %106 = vmatprep.subr.mxu0 0.0
    %107 = vmatpush1.msra.mxu0 %v87
    %108 = vmatprep.subr.mxu0 0.0
    %109 = vmatpush1.msra.mxu0 %v88
    %110 = vmatprep.subr.mxu0 0.0
    %111 = vmatpush1.msra.mxu0 %v89
    %112 = vmatprep.subr.mxu0 0.0
    %113 = vmatpush1.msra.mxu0 %v90
    %114 = vmatprep.subr.mxu0 0.0
    %115 = vmatpush1.msra.mxu0 %v91
    %116 = vmatprep.subr.mxu0 0.0
    %117 = vmatpush1.msra.mxu0 %v92
    %118 = vmatprep.subr.mxu0 0.0
    %119 = vmatpush1.msra.mxu0 %v93
    %120 = vmatprep.subr.mxu0 0.0
    %121 = vmatpush1.msra.mxu0 %v94
    %122 = vmatprep.subr.mxu0 0.0
    %123 = vmatpush1.msra.mxu0 0.0
    %124 = vmatprep.subr.mxu0 0.0
    %125 = vmatpush1.msra.mxu0 0.0
    %126 = vmatprep.subr.mxu0 0.0
    %127 = vmatpush1.msra.mxu0 0.0
    %128 = vmatprep.subr.mxu0 0.0
    %129 = vmatpush1.msra.mxu0 0.0
    %130 = vmatprep.subr.mxu0 0.0
    %131 = vmatpush1.msra.mxu0 0.0
    %132 = vmatprep.subr.mxu0 0.0
    %133 = vmatpush1.msra.mxu0 0.0
    %134 = vmatprep.subr.mxu0 0.0
    %135 = vmatpush1.msra.mxu0 0.0
    %136 = vmatprep.subr.mxu0 0.0
    %137 = vmatpush1.msra.mxu0 0.0
    %138 = vmatprep.subr.mxu0 0.0
    %139 = vmatpush1.msra.mxu0 0.0
    %140 = vmatprep.subr.mxu0 0.0
    %141 = vmatpush1.msra.mxu0 0.0
    %142 = vmatprep.subr.mxu0 0.0
    %143 = vmatpush1.msra.mxu0 0.0
    %144 = vmatprep.subr.mxu0 0.0
    %145 = vmatpush1.msra.mxu0 0.0
    %146 = vmatprep.subr.mxu0 0.0
    %147 = vmatpush1.msra.mxu0 0.0
    %148 = vmatprep.subr.mxu0 0.0
    %149 = vmatpush1.msra.mxu0 0.0
    %150 = vmatprep.subr.mxu0 0.0
    %151 = vmatpush1.msra.mxu0 0.0
    %152 = vmatprep.subr.mxu0 0.0
    %153 = vmatpush1.msra.mxu0 0.0
    %154 = vmatprep.subr.mxu0 0.0
    %155 = vmatpush1.msra.mxu0 0.0
    %156 = vmatprep.subr.mxu0 0.0
    %157 = vmatpush1.msra.mxu0 0.0
    %158 = vmatprep.subr.mxu0 0.0
    %159 = vmatpush1.msra.mxu0 0.0
    %160 = vmatprep.subr.mxu0 0.0
    %161 = vmatpush1.msra.mxu0 0.0
    %162 = vmatprep.subr.mxu0 0.0
    %163 = vmatpush1.msra.mxu0 0.0
    %164 = vmatprep.subr.mxu0 0.0
    %165 = vmatpush1.msra.mxu0 0.0
    %166 = vmatprep.subr.mxu0 0.0
    %167 = vmatpush1.msra.mxu0 0.0
    %168 = vmatprep.subr.mxu0 0.0
    %169 = vmatpush1.msra.mxu0 0.0
    %170 = vmatprep.mubr.f32.mxu0 0.0
    %171 = vmatmul.mubr.f32.gmra.mrb[0].mxu0 %v104
    %v172 = vpop.f32.mrb[0].mxu0
    %v173 = vadd.f32 %v100, %v172
    %v174 = vpop.f32.mrb[0].mxu0
    %175 = vdwg.mxu0
    %v176 = vmax.f32 %v173, 0.0
    %v178 = vsel %vm102, %v176, 0
    %180 = vmatprep.subr.mxu0 0.0
    %181 = vmatpush1.msra.mxu0 %v87
    %182 = vmatprep.subr.mxu0 0.0
    %183 = vmatpush1.msra.mxu0 %v88
    %184 = vmatprep.subr.mxu0 0.0
    %185 = vmatpush1.msra.mxu0 %v89
    %186 = vmatprep.subr.mxu0 0.0
    %187 = vmatpush1.msra.mxu0 %v90
    %188 = vmatprep.subr.mxu0 0.0
    %189 = vmatpush1.msra.mxu0 %v91
    %190 = vmatprep.subr.mxu0 0.0
    %191 = vmatpush1.msra.mxu0 %v92
    %192 = vmatprep.subr.mxu0 0.0
    %193 = vmatpush1.msra.mxu0 %v93
    %194 = vmatprep.subr.mxu0 0.0
    %195 = vmatpush1.msra.mxu0 %v94
    %196 = vmatprep.subr.mxu0 0.0
    %197 = vmatpush1.msra.mxu0 0.0
    %198 = vmatprep.subr.mxu0 0.0
    %199 = vmatpush1.msra.mxu0 0.0
    %200 = vmatprep.subr.mxu0 0.0
    %201 = vmatpush1.msra.mxu0 0.0
    %202 = vmatprep.subr.mxu0 0.0
    %203 = vmatpush1.msra.mxu0 0.0
    %204 = vmatprep.subr.mxu0 0.0
    %205 = vmatpush1.msra.mxu0 0.0
    %206 = vmatprep.subr.mxu0 0.0
    %207 = vmatpush1.msra.mxu0 0.0
    %208 = vmatprep.subr.mxu0 0.0
    %209 = vmatpush1.msra.mxu0 0.0
    %210 = vmatprep.subr.mxu0 0.0
    %211 = vmatpush1.msra.mxu0 0.0
    %212 = vmatprep.subr.mxu0 0.0
    %213 = vmatpush1.msra.mxu0 0.0
    %214 = vmatprep.subr.mxu0 0.0
    %215 = vmatpush1.msra.mxu0 0.0
    %216 = vmatprep.subr.mxu0 0.0
    %217 = vmatpush1.msra.mxu0 0.0
    %218 = vmatprep.subr.mxu0 0.0
    %219 = vmatpush1.msra.mxu0 0.0
    %220 = vmatprep.subr.mxu0 0.0
    %221 = vmatpush1.msra.mxu0 0.0
    %222 = vmatprep.subr.mxu0 0.0
    %223 = vmatpush1.msra.mxu0 0.0
    %224 = vmatprep.subr.mxu0 0.0
    %225 = vmatpush1.msra.mxu0 0.0
    %226 = vmatprep.subr.mxu0 0.0
    %227 = vmatpush1.msra.mxu0 0.0
    %228 = vmatprep.subr.mxu0 0.0
    %229 = vmatpush1.msra.mxu0 0.0
    %230 = vmatprep.subr.mxu0 0.0
    %231 = vmatpush1.msra.mxu0 0.0
    %232 = vmatprep.subr.mxu0 0.0
    %233 = vmatpush1.msra.mxu0 0.0
    %234 = vmatprep.subr.mxu0 0.0
    %235 = vmatpush1.msra.mxu0 0.0
    %236 = vmatprep.subr.mxu0 0.0
    %237 = vmatpush1.msra.mxu0 0.0
    %238 = vmatprep.subr.mxu0 0.0
    %239 = vmatpush1.msra.mxu0 0.0
    %240 = vmatprep.subr.mxu0 0.0
    %241 = vmatpush1.msra.mxu0 0.0
    %242 = vmatprep.subr.mxu0 0.0
    %243 = vmatpush1.msra.mxu0 0.0
    %244 = vmatprep.mubr.f32.mxu0 0.0
    %245 = vmatmul.mubr.f32.gmra.mrb[0].mxu0 %v178
    %v246 = vpop.f32.mrb[0].mxu0
    %v247 = vadd.f32 %v100, %v246
    %v248 = vpop.f32.mrb[0].mxu0
    %249 = vdwg.mxu0
    %v250 = vmax.f32 %v247, 0.0
    %v251 = vld [vmem:[#allocation5] sm:$0xff]
    %v252 = vld [vmem:[#allocation5 + $0x8] sm:$0xff]
    %v253 = vld [vmem:[#allocation5 + $0x10] sm:$0xff]
    %v254 = vld [vmem:[#allocation5 + $0x18] sm:$0xff]
    %v255 = vld [vmem:[#allocation5 + $0x20] sm:$0xff]
    %v256 = vld [vmem:[#allocation5 + $0x28] sm:$0xff]
    %v257 = vld [vmem:[#allocation5 + $0x30] sm:$0xff]
    %v258 = vld [vmem:[#allocation5 + $0x38] sm:$0xff]
    %v259 = vld [vmem:[#allocation5 + $0x40] sm:$0xff]
    %v260 = vld [vmem:[#allocation5 + $0x48] sm:$0xff]
    %v261 = vld [vmem:[#allocation5 + $0x50] sm:$0xff]
    %v262 = vld [vmem:[#allocation5 + $0x58] sm:$0xff]
    %v263 = vld [vmem:[#allocation5 + $0x60] sm:$0xff]
    %v264 = vld [vmem:[#allocation5 + $0x68] sm:$0xff]
    %v265 = vld [vmem:[#allocation5 + $0x70] sm:$0xff]
    %v266 = vld [vmem:[#allocation5 + $0x78] sm:$0xff]
    %v267 = vld [vmem:[%s6] sm:$0x3]
    %v269 = vlaneseq
    %v270 = vshrl.u32 %v269, 7
    %v271 = vsub.s32 0, %v270
    %v272 = vrot.slane %v267, %v271
    %v273 = vlaneseq
    %v274 = vshrl.u32 %v273, 7
    %v275 = vsub.s32 1, %v274
    %v276 = vrot.slane %v267, %v275
    %v280 = vsel %vm102, %v250, 0
    %282 = vmatprep.subr.mxu0 %v252
    %283 = vmatpush1.msra.mxu0 %v251
    %284 = vmatprep.subr.mxu0 %v254
    %285 = vmatpush1.msra.mxu0 %v253
    %286 = vmatprep.subr.mxu0 %v256
    %287 = vmatpush1.msra.mxu0 %v255
    %288 = vmatprep.subr.mxu0 %v258
    %289 = vmatpush1.msra.mxu0 %v257
    %290 = vmatprep.subr.mxu0 %v260
    %291 = vmatpush1.msra.mxu0 %v259
    %292 = vmatprep.subr.mxu0 %v262
    %293 = vmatpush1.msra.mxu0 %v261
    %294 = vmatprep.subr.mxu0 %v264
    %295 = vmatpush1.msra.mxu0 %v263
    %296 = vmatprep.subr.mxu0 %v266
    %297 = vmatpush1.msra.mxu0 %v265
    %298 = vmatprep.subr.mxu0 0.0
    %299 = vmatpush1.msra.mxu0 0.0
    %300 = vmatprep.subr.mxu0 0.0
    %301 = vmatpush1.msra.mxu0 0.0
    %302 = vmatprep.subr.mxu0 0.0
    %303 = vmatpush1.msra.mxu0 0.0
    %304 = vmatprep.subr.mxu0 0.0
    %305 = vmatpush1.msra.mxu0 0.0
    %306 = vmatprep.subr.mxu0 0.0
    %307 = vmatpush1.msra.mxu0 0.0
    %308 = vmatprep.subr.mxu0 0.0
    %309 = vmatpush1.msra.mxu0 0.0
    %310 = vmatprep.subr.mxu0 0.0
    %311 = vmatpush1.msra.mxu0 0.0
    %312 = vmatprep.subr.mxu0 0.0
    %313 = vmatpush1.msra.mxu0 0.0
    %314 = vmatprep.subr.mxu0 0.0
    %315 = vmatpush1.msra.mxu0 0.0
    %316 = vmatprep.subr.mxu0 0.0
    %317 = vmatpush1.msra.mxu0 0.0
    %318 = vmatprep.subr.mxu0 0.0
    %319 = vmatpush1.msra.mxu0 0.0
    %320 = vmatprep.subr.mxu0 0.0
    %321 = vmatpush1.msra.mxu0 0.0
    %322 = vmatprep.subr.mxu0 0.0
    %323 = vmatpush1.msra.mxu0 0.0
    %324 = vmatprep.subr.mxu0 0.0
    %325 = vmatpush1.msra.mxu0 0.0
    %326 = vmatprep.subr.mxu0 0.0
    %327 = vmatpush1.msra.mxu0 0.0
    %328 = vmatprep.subr.mxu0 0.0
    %329 = vmatpush1.msra.mxu0 0.0
    %330 = vmatprep.subr.mxu0 0.0
    %331 = vmatpush1.msra.mxu0 0.0
    %332 = vmatprep.subr.mxu0 0.0
    %333 = vmatpush1.msra.mxu0 0.0
    %334 = vmatprep.subr.mxu0 0.0
    %335 = vmatpush1.msra.mxu0 0.0
    %336 = vmatprep.subr.mxu0 0.0
    %337 = vmatpush1.msra.mxu0 0.0
    %338 = vmatprep.subr.mxu0 0.0
    %339 = vmatpush1.msra.mxu0 0.0
    %340 = vmatprep.subr.mxu0 0.0
    %341 = vmatpush1.msra.mxu0 0.0
    %342 = vmatprep.subr.mxu0 0.0
    %343 = vmatpush1.msra.mxu0 0.0
    %344 = vmatprep.subr.mxu0 0.0
    %345 = vmatpush1.msra.mxu0 0.0
    %346 = vmatprep.mubr.f32.mxu0 0.0
    %347 = vmatmul.mubr.f32.gmra.mrb[0].mxu0 %v280
    %v348 = vpop.f32.mrb[0].mxu0
    %v349 = vadd.f32 %v272, %v348
    %v350 = vpop.f32.mrb[0].mxu0
    %v351 = vadd.f32 %v276, %v350
    %352 = vdwg.mxu0
    %353 = vst [vmem:[#allocation7] sm:$0xff] %v349
    %vm354 = vcmask 424960
    %355 = vst.msk [vmem:[#allocation7 + $0x8] sm:$0xff] %vm354, %v351
    // Predicated region
    $region38: #{netc_forward.1} parent=1 // pred_check
      _
    $region39: #{netc_forward.1} parent=1 // pred_check_branch
      %357 = sbr.rel (0) target = $region41
    $region40: #{netc_forward.1} parent=1 // pred_region
      %s359 = ssub.s32 256, 256
      %360 = vsyncadd [#allocation4], %s359
      %s362 = sshll.u32 [#allocation7], 4
      %s363 = int_to_ptr.vmem [resolvable:$true] %s362
      %365 = dma.vmem_to_hbm [thread:$0]  %s363, 256, %s7, [#allocation4]
    $region41: #{netc_forward.1} parent=1 // pred_fallthru
      _
    // Predicated region
    $region42: #{netc_forward.1} parent=1 // pred_check
      _
    $region43: #{netc_forward.1} parent=1 // pred_check_branch
      %367 = sbr.rel (0) target = $region45
    $region44: #{netc_forward.1} parent=1 // pred_region
      %368 = dma.done [#allocation4], 256
    $region45: #{netc_forward.1} parent=1 // pred_fallthru
      _
    %369 = vsyncpa [#allocation3], 1
    %370 = vsyncpa [#allocation6], 1
    %371 = vsyncpa [#allocation4], 1

</llo_original>
